<compile_context>
chip_gen: v7x
topology: tpu7x:2x2x1
jax: 0.10.0
libtpu: 0.0.40
codegen_flags: <defaults>
</compile_context>

<pallas_src>
import jax
import jax.numpy as jnp
from jax.experimental import pallas as pl
from jax.experimental.pallas import tpu as pltpu

HIDDEN_NDOF = 2                  # n
Z_DIM = 2 * HIDDEN_NDOF          # z_dim = 4
HIDDEN_DIM = 128                 # hidden_dim
_MAX_TILE = 1024                 # batch tile cap (fits v7x VMEM with big headroom)


def neural_modal_odefunc_kernel(zq_ref, w1t_ref, wfix_ref, w2t_ref, w3pad_ref, o_ref):
    """One batch tile per grid step; weights are VMEM-resident across the grid.

    zq_ref    : (TB, Z_DIM)          f32
    w1t_ref   : (Z_DIM, HIDDEN_DIM)  f32   = W1.T          (VPU path)
    wfix_ref  : (Z_DIM, Z_DIM)       f32   = [S | A.T]     (VPU path)
    w2t_ref   : (HIDDEN_DIM, HIDDEN_DIM) bf16 = W2.T       (MXU)
    w3pad_ref : (HIDDEN_DIM, Z_DIM)  bf16  = [0 | W3.T]    (MXU)
    o_ref     : (TB, Z_DIM)          f32
    """
    zq = zq_ref[...]                                   # (TB, Z_DIM) f32

    # Front layer (K=4) + fixed [qd | A.zq] path: broadcast-FMAs on the VPU,
    # zero MXU pushes. Each zq column is lane-broadcast once and reused.
    h1_pre = jnp.zeros((zq.shape[0], HIDDEN_DIM), jnp.float32)
    fixed = jnp.zeros((zq.shape[0], Z_DIM), jnp.float32)
    for k in range(Z_DIM):                             # Z_DIM == 4, fully unrolled
        col = zq[:, k:k + 1]                           # (TB, 1) lane-broadcast source
        h1_pre = h1_pre + col * w1t_ref[k:k + 1, :]    # (TB, HIDDEN_DIM)
        fixed = fixed + col * wfix_ref[k:k + 1, :]     # (TB, Z_DIM), stays f32

    # ReLU in f32 (v5e VPU has no bf16); cast to bf16 only for the MXU dots.
    h1 = jnp.maximum(h1_pre, 0.0).astype(jnp.bfloat16)
    h2_pre = jnp.dot(h1, w2t_ref[...], preferred_element_type=jnp.float32)
    h2 = jnp.maximum(h2_pre, 0.0).astype(jnp.bfloat16)

    # h2 @ w3pad = [0, trans_net(zq)]  -> add fixed, land directly in output layout.
    net = jnp.dot(h2, w3pad_ref[...], preferred_element_type=jnp.float32)
    o_ref[...] = (fixed + net).astype(o_ref.dtype)


def prepare_params(A, W1, W2, W3):
    """Host-side, ONE-TIME weight packing (call outside the ODE solver loop).

    A : (n, 2n)       fixed modal matrix (trans_A weight)
    W1: (hidden, 2n)  trans_net layer-0 weight   (PyTorch (out, in) layout)
    W2: (hidden, hidden)
    W3: (n, hidden)
    """
    n = HIDDEN_NDOF
    # Selection matrix: zq @ S == zq[:, n:]
    S = jnp.concatenate([jnp.zeros((n, n), jnp.float32),
                         jnp.eye(n, dtype=jnp.float32)], axis=0)            # (Z_DIM, n)
    wfix = jnp.concatenate([S, A.T.astype(jnp.float32)], axis=1)            # (Z_DIM, Z_DIM) f32
    w1t = W1.T.astype(jnp.float32)                                          # (Z_DIM, HIDDEN) f32 (VPU path)
    w2t = W2.T.astype(jnp.bfloat16)                                         # (HIDDEN, HIDDEN) bf16
    w3pad = jnp.concatenate([jnp.zeros((HIDDEN_DIM, n), jnp.float32),
                             W3.T.astype(jnp.float32)],
                            axis=1).astype(jnp.bfloat16)                    # (HIDDEN, Z_DIM) bf16
    return w1t, wfix, w2t, w3pad


def _round_up(x, m):
    return ((x + m - 1) // m) * m


def _choose_tile(B):
    """Big tiles to amortize ~0.35us/step overhead; >=2 grid steps when there is
    enough work (v7x dual TensorCore); always a multiple of 8 (sublane rule)."""
    if B > _MAX_TILE:
        return _MAX_TILE
    if B >= 256:
        return _round_up(pl.cdiv(B, 2), 8)      # two grid steps
    return max(8, _round_up(B, 8))              # single padded tile (dispatch-bound anyway)


@jax.jit
def neural_modal_odefunc(zq, w1t, wfix, w2t, w3pad):
    """zq: (B, Z_DIM) -> zq_dot: (B, Z_DIM). Weights must come from prepare_params."""
    B = zq.shape[0]
    tb = _choose_tile(B)
    Bp = _round_up(B, tb)
    zq_p = jnp.pad(zq, ((0, Bp - B), (0, 0))) if Bp != B else zq
    grid = (Bp // tb,)

    const2 = lambda i: (0, 0)   # weights: same block every step -> VMEM-resident
    flops = 2 * Bp * (Z_DIM * HIDDEN_DIM + HIDDEN_DIM * HIDDEN_DIM
                      + HIDDEN_DIM * Z_DIM + Z_DIM * Z_DIM)
    bytes_accessed = (Bp * Z_DIM * 4 * 2                                   # zq in + out (f32)
                      + Z_DIM * HIDDEN_DIM * 4 + Z_DIM * Z_DIM * 4        # w1t, wfix (f32)
                      + HIDDEN_DIM * HIDDEN_DIM * 2 + HIDDEN_DIM * Z_DIM * 2)  # bf16 weights

    out = pl.pallas_call(
        neural_modal_odefunc_kernel,
        out_shape=jax.ShapeDtypeStruct((Bp, Z_DIM), zq.dtype),
        grid=grid,
        in_specs=[
            pl.BlockSpec((tb, Z_DIM), lambda i: (i, 0)),
            pl.BlockSpec((Z_DIM, HIDDEN_DIM), const2),
            pl.BlockSpec((Z_DIM, Z_DIM), const2),
            pl.BlockSpec((HIDDEN_DIM, HIDDEN_DIM), const2),
            pl.BlockSpec((HIDDEN_DIM, Z_DIM), const2),
        ],
        out_specs=pl.BlockSpec((tb, Z_DIM), lambda i: (i, 0)),
        compiler_params=pltpu.CompilerParams(
            dimension_semantics=("parallel",)),
        cost_estimate=pl.CostEstimate(flops=flops, transcendentals=0,
                                      bytes_accessed=bytes_accessed),
    )(zq_p, w1t, wfix, w2t, w3pad)
    return out[:B] if Bp != B else out


def reference(zq, A, W1, W2, W3):
    qd = zq[:, HIDDEN_NDOF:]
    lin = zq @ A.T
    h1 = jax.nn.relu(zq @ W1.T)
    h2 = jax.nn.relu(h1 @ W2.T)
    net = h2 @ W3.T
    return jnp.concatenate([qd, lin + net], axis=-1)


def make_params(key):
    """Deterministic synthetic parameters matching the module's __init__ shapes."""
    k_om, k_xi, k_w1, k_w2, k_w3 = jax.random.split(key, 5)

    # Modal quantities (Omega, Xi) -> fixed A = [-K, -C], shape (n, 2n)
    omega = jax.random.uniform(k_om, (HIDDEN_NDOF,), jnp.float32, 1.0, 5.0)
    xi = jax.random.uniform(k_xi, (HIDDEN_NDOF,), jnp.float32, 0.01, 0.1)
    K = jnp.diag(omega ** 2)
    C = jnp.diag(2.0 * xi * omega)
    A = jnp.concatenate([-K, -C], axis=1)              # (n, 2n)

    # trans_net weights (bias-free), xavier-normal-ish init (PyTorch (out, in) layout)
    def xavier(k, shape):
        fan_out, fan_in = shape
        std = (2.0 / (fan_in + fan_out)) ** 0.5
        return std * jax.random.normal(k, shape, jnp.float32)

    W1 = xavier(k_w1, (HIDDEN_DIM, Z_DIM))             # Linear(z_dim -> hidden)
    W2 = xavier(k_w2, (HIDDEN_DIM, HIDDEN_DIM))        # Linear(hidden -> hidden)
    W3 = xavier(k_w3, (HIDDEN_NDOF, HIDDEN_DIM))       # Linear(hidden -> n)
    return A, W1, W2, W3


if __name__ == "__main__":
    key = jax.random.PRNGKey(0)
    k_z, k_p, k_z2 = jax.random.split(key, 3)

    A, W1, W2, W3 = make_params(k_p)
    # One-time host-side packing (outside the ODE solver loop).
    params = prepare_params(A, W1, W2, W3)

    # Small demo batch (shape the ODE solver would feed per evaluation).
    B = 8
    zq = jax.random.normal(k_z, (B, Z_DIM), jnp.float32)
    out = jax.block_until_ready(neural_modal_odefunc(zq, *params))
    ref = reference(zq, A, W1, W2, W3)
    assert out.shape == (B, Z_DIM)
    # qd passthrough + A.zq path is pure f32 -> tight; bf16 net path -> loose overall.
    assert jnp.allclose(out[:, :HIDDEN_NDOF], ref[:, :HIDDEN_NDOF], atol=1e-5, rtol=1e-5), \
        "qd passthrough mismatch"
    assert jnp.allclose(out, ref, atol=2e-2, rtol=2e-2), "mismatch vs reference"

    # Non-tile-multiple batch: exercises the padding path and a 2-step grid.
    B2 = 300
    zq2 = jax.random.normal(k_z2, (B2, Z_DIM), jnp.float32)
    out2 = jax.block_until_ready(neural_modal_odefunc(zq2, *params))
    ref2 = reference(zq2, A, W1, W2, W3)
    assert out2.shape == (B2, Z_DIM)
    assert jnp.allclose(out2, ref2, atol=2e-2, rtol=2e-2), "mismatch vs reference (padded)"

    print("KERNEL_OK")
</pallas_src>

<mosaic_0001>
module attributes {stable_mosaic.version = 11 : i64} {
  func.func @neural_modal_odefunc_kernel(%arg0: i32, %arg1: memref<8x4xf32, #tpu.memory_space<vmem>>, %arg2: memref<4x128xf32, #tpu.memory_space<vmem>>, %arg3: memref<4x4xf32, #tpu.memory_space<vmem>>, %arg4: memref<128x128xbf16, #tpu.memory_space<vmem>>, %arg5: memref<128x4xbf16, #tpu.memory_space<vmem>>, %arg6: memref<8x4xf32, #tpu.memory_space<vmem>>) attributes {dimension_semantics = [#tpu.dimension_semantics<parallel>], iteration_bounds = array<i64: 1>, scalar_prefetch = 0 : i64, scratch_operands = 0 : i64, tpu.core_type = #tpu.core_type<tc>, window_params = [{transform_indices = @transform_0, window_bounds = array<i64: 8, 4>}, {pipeline_mode = #tpu.pipeline_mode<synchronous>, transform_indices = @transform_1, window_bounds = array<i64: 4, 128>}, {pipeline_mode = #tpu.pipeline_mode<synchronous>, transform_indices = @transform_2, window_bounds = array<i64: 4, 4>}, {pipeline_mode = #tpu.pipeline_mode<synchronous>, transform_indices = @transform_3, window_bounds = array<i64: 128, 128>}, {pipeline_mode = #tpu.pipeline_mode<synchronous>, transform_indices = @transform_4, window_bounds = array<i64: 128, 4>}, {transform_indices = @transform_5, window_bounds = array<i64: 8, 4>}]} {
    %c0 = arith.constant 0 : index
    %c0_0 = arith.constant 0 : index
    %0 = vector.load %arg1[%c0, %c0_0] : memref<8x4xf32, #tpu.memory_space<vmem>>, vector<8x4xf32>
    %cst = arith.constant 0.000000e+00 : f32
    %1 = vector.broadcast %cst : f32 to vector<8x128xf32>
    %cst_1 = arith.constant 0.000000e+00 : f32
    %2 = vector.broadcast %cst_1 : f32 to vector<8x4xf32>
    %3 = vector.extract_strided_slice %0 {offsets = [0, 0], sizes = [8, 1], strides = [1, 1]} : vector<8x4xf32> to vector<8x1xf32>
    %c0_2 = arith.constant 0 : index
    %c0_3 = arith.constant 0 : index
    %4 = vector.load %arg2[%c0_2, %c0_3] : memref<4x128xf32, #tpu.memory_space<vmem>>, vector<1x128xf32>
    %5 = vector.broadcast %3 : vector<8x1xf32> to vector<8x128xf32>
    %6 = vector.broadcast %4 : vector<1x128xf32> to vector<8x128xf32>
    %7 = arith.mulf %5, %6 : vector<8x128xf32>
    %8 = arith.addf %1, %7 : vector<8x128xf32>
    %c0_4 = arith.constant 0 : index
    %c0_5 = arith.constant 0 : index
    %9 = vector.load %arg3[%c0_4, %c0_5] : memref<4x4xf32, #tpu.memory_space<vmem>>, vector<1x4xf32>
    %10 = vector.broadcast %3 : vector<8x1xf32> to vector<8x4xf32>
    %11 = vector.broadcast %9 : vector<1x4xf32> to vector<8x4xf32>
    %12 = arith.mulf %10, %11 : vector<8x4xf32>
    %13 = arith.addf %2, %12 : vector<8x4xf32>
    %14 = vector.extract_strided_slice %0 {offsets = [0, 1], sizes = [8, 1], strides = [1, 1]} : vector<8x4xf32> to vector<8x1xf32>
    %c1 = arith.constant 1 : index
    %c0_6 = arith.constant 0 : index
    %15 = vector.load %arg2[%c1, %c0_6] : memref<4x128xf32, #tpu.memory_space<vmem>>, vector<1x128xf32>
    %16 = vector.broadcast %14 : vector<8x1xf32> to vector<8x128xf32>
    %17 = vector.broadcast %15 : vector<1x128xf32> to vector<8x128xf32>
    %18 = arith.mulf %16, %17 : vector<8x128xf32>
    %19 = arith.addf %8, %18 : vector<8x128xf32>
    %c1_7 = arith.constant 1 : index
    %c0_8 = arith.constant 0 : index
    %20 = vector.load %arg3[%c1_7, %c0_8] : memref<4x4xf32, #tpu.memory_space<vmem>>, vector<1x4xf32>
    %21 = vector.broadcast %14 : vector<8x1xf32> to vector<8x4xf32>
    %22 = vector.broadcast %20 : vector<1x4xf32> to vector<8x4xf32>
    %23 = arith.mulf %21, %22 : vector<8x4xf32>
    %24 = arith.addf %13, %23 : vector<8x4xf32>
    %25 = vector.extract_strided_slice %0 {offsets = [0, 2], sizes = [8, 1], strides = [1, 1]} : vector<8x4xf32> to vector<8x1xf32>
    %c2 = arith.constant 2 : index
    %c0_9 = arith.constant 0 : index
    %26 = vector.load %arg2[%c2, %c0_9] : memref<4x128xf32, #tpu.memory_space<vmem>>, vector<1x128xf32>
    %27 = vector.broadcast %25 : vector<8x1xf32> to vector<8x128xf32>
    %28 = vector.broadcast %26 : vector<1x128xf32> to vector<8x128xf32>
    %29 = arith.mulf %27, %28 : vector<8x128xf32>
    %30 = arith.addf %19, %29 : vector<8x128xf32>
    %c2_10 = arith.constant 2 : index
    %c0_11 = arith.constant 0 : index
    %31 = vector.load %arg3[%c2_10, %c0_11] : memref<4x4xf32, #tpu.memory_space<vmem>>, vector<1x4xf32>
    %32 = vector.broadcast %25 : vector<8x1xf32> to vector<8x4xf32>
    %33 = vector.broadcast %31 : vector<1x4xf32> to vector<8x4xf32>
    %34 = arith.mulf %32, %33 : vector<8x4xf32>
    %35 = arith.addf %24, %34 : vector<8x4xf32>
    %36 = vector.extract_strided_slice %0 {offsets = [0, 3], sizes = [8, 1], strides = [1, 1]} : vector<8x4xf32> to vector<8x1xf32>
    %c3 = arith.constant 3 : index
    %c0_12 = arith.constant 0 : index
    %37 = vector.load %arg2[%c3, %c0_12] : memref<4x128xf32, #tpu.memory_space<vmem>>, vector<1x128xf32>
    %38 = vector.broadcast %36 : vector<8x1xf32> to vector<8x128xf32>
    %39 = vector.broadcast %37 : vector<1x128xf32> to vector<8x128xf32>
    %40 = arith.mulf %38, %39 : vector<8x128xf32>
    %41 = arith.addf %30, %40 : vector<8x128xf32>
    %c3_13 = arith.constant 3 : index
    %c0_14 = arith.constant 0 : index
    %42 = vector.load %arg3[%c3_13, %c0_14] : memref<4x4xf32, #tpu.memory_space<vmem>>, vector<1x4xf32>
    %43 = vector.broadcast %36 : vector<8x1xf32> to vector<8x4xf32>
    %44 = vector.broadcast %42 : vector<1x4xf32> to vector<8x4xf32>
    %45 = arith.mulf %43, %44 : vector<8x4xf32>
    %46 = arith.addf %35, %45 : vector<8x4xf32>
    %cst_15 = arith.constant 0.000000e+00 : f32
    %47 = vector.broadcast %cst_15 : f32 to vector<8x128xf32>
    %48 = arith.maximumf %41, %47 : vector<8x128xf32>
    %49 = arith.truncf %48 : vector<8x128xf32> to vector<8x128xbf16>
    %c0_16 = arith.constant 0 : index
    %c0_17 = arith.constant 0 : index
    %50 = vector.load %arg4[%c0_16, %c0_17] : memref<128x128xbf16, #tpu.memory_space<vmem>>, vector<128x128xbf16>
    %cst_18 = arith.constant dense<0.000000e+00> : vector<8x128xf32>
    %51 = tpu.matmul %49, %50, %cst_18 {dimension_numbers = #tpu.dot_dimension_numbers<[1], [0], [0], [1], [0, 0, 1, 1], [], []>} : vector<8x128xbf16>, vector<128x128xbf16>, vector<8x128xf32> -> vector<8x128xf32>
    %cst_19 = arith.constant 0.000000e+00 : f32
    %52 = vector.broadcast %cst_19 : f32 to vector<8x128xf32>
    %53 = arith.maximumf %51, %52 : vector<8x128xf32>
    %54 = arith.truncf %53 : vector<8x128xf32> to vector<8x128xbf16>
    %c0_20 = arith.constant 0 : index
    %c0_21 = arith.constant 0 : index
    %55 = vector.load %arg5[%c0_20, %c0_21] : memref<128x4xbf16, #tpu.memory_space<vmem>>, vector<128x4xbf16>
    %cst_22 = arith.constant dense<0.000000e+00> : vector<8x4xf32>
    %56 = tpu.matmul %54, %55, %cst_22 {dimension_numbers = #tpu.dot_dimension_numbers<[1], [0], [0], [1], [0, 0, 1, 1], [], []>} : vector<8x128xbf16>, vector<128x4xbf16>, vector<8x4xf32> -> vector<8x4xf32>
    %57 = arith.addf %46, %56 : vector<8x4xf32>
    %c0_23 = arith.constant 0 : index
    %c0_24 = arith.constant 0 : index
    %58 = vector.load %arg6[%c0_23, %c0_24] : memref<8x4xf32, #tpu.memory_space<vmem>>, vector<8x4xf32>
    tpu.vector_store %arg6[%c0_23, %c0_24], %57 {strides = array<i32>} : memref<8x4xf32, #tpu.memory_space<vmem>>, vector<8x4xf32>,
    return
  }
  func.func @transform_0(%arg0: i32) -> (i32, i32) {
    %c0_i32 = arith.constant 0 : i32
    %c0_i32_0 = arith.constant 0 : i32
    return %arg0, %c0_i32 : i32, i32
  }
  func.func @transform_1(%arg0: i32) -> (i32, i32) {
    %c0_i32 = arith.constant 0 : i32
    %c0_i32_0 = arith.constant 0 : i32
    %c0_i32_1 = arith.constant 0 : i32
    return %c0_i32, %c0_i32_0 : i32, i32
  }
  func.func @transform_2(%arg0: i32) -> (i32, i32) {
    %c0_i32 = arith.constant 0 : i32
    %c0_i32_0 = arith.constant 0 : i32
    %c0_i32_1 = arith.constant 0 : i32
    return %c0_i32, %c0_i32_0 : i32, i32
  }
  func.func @transform_3(%arg0: i32) -> (i32, i32) {
    %c0_i32 = arith.constant 0 : i32
    %c0_i32_0 = arith.constant 0 : i32
    %c0_i32_1 = arith.constant 0 : i32
    return %c0_i32, %c0_i32_0 : i32, i32
  }
  func.func @transform_4(%arg0: i32) -> (i32, i32) {
    %c0_i32 = arith.constant 0 : i32
    %c0_i32_0 = arith.constant 0 : i32
    %c0_i32_1 = arith.constant 0 : i32
    return %c0_i32, %c0_i32_0 : i32, i32
  }
  func.func @transform_5(%arg0: i32) -> (i32, i32) {
    %c0_i32 = arith.constant 0 : i32
    %c0_i32_0 = arith.constant 0 : i32
    return %arg0, %c0_i32 : i32, i32
  }
}

</mosaic_0001>

<llo_original>
// kernel: neural_modal_odefunc.1
$region0: #{neural_modal_odefunc.1}
  #allocation0 [shape = 'u32[]', space=smem, size = 0x4, offset = 0x4, fixed_abs, tag = 'smem constant byte address 0x4 - core index']
  #allocation1 [shape = 'u32[144,128]{1,0:T(1,128)}', space=vmem, size = 0x12000, scoped, tag = 'internal scratch']
  %s0 = inlined_call_operand.vmem [shape: f32[8,4], index: 0, kind: input, shape index: {}]
  %s1 = inlined_call_operand.vmem [shape: f32[4,128], index: 1, kind: input, shape index: {}]
  %s2 = inlined_call_operand.vmem [shape: f32[4,4], index: 2, kind: input, shape index: {}]
  %s3 = inlined_call_operand.vmem [shape: bf16[128,128], index: 3, kind: input, shape index: {}]
  %s4 = inlined_call_operand.vmem [shape: bf16[128,4], index: 4, kind: input, shape index: {}]
  %s5 = inlined_call_operand.vmem [shape: f32[8,4], index: 5, kind: output, shape index: {}]
  %s6 = sld [smem:[#allocation0]]
  $region30: #{neural_modal_odefunc.1} parent=0
    _
  %s8 = ssub.s32 1, %s6
  %s9 = scalar_select 0, %s8, %s6
  // Predicated region
  $region2: #{neural_modal_odefunc.1} parent=0 // pred_check
    _
  $region3: #{neural_modal_odefunc.1} parent=0 // pred_check_branch
    %11 = sbr.rel (0) target = $region5
  $region4: #{neural_modal_odefunc.1} parent=0 // pred_region
    _
  $region5: #{neural_modal_odefunc.1} parent=0 // pred_fallthru
    _
  // Predicated region
  $region6: #{neural_modal_odefunc.1} parent=0 // pred_check
    _
  $region7: #{neural_modal_odefunc.1} parent=0 // pred_check_branch
    %13 = sbr.rel (0) target = $region9
  $region8: #{neural_modal_odefunc.1} parent=0 // pred_region
    _
  $region9: #{neural_modal_odefunc.1} parent=0 // pred_fallthru
    _
  // Predicated region
  $region10: #{neural_modal_odefunc.1} parent=0 // pred_check
    _
  $region11: #{neural_modal_odefunc.1} parent=0 // pred_check_branch
    %15 = sbr.rel (0) target = $region13
  $region12: #{neural_modal_odefunc.1} parent=0 // pred_region
    _
  $region13: #{neural_modal_odefunc.1} parent=0 // pred_fallthru
    _
  // Predicated region
  $region14: #{neural_modal_odefunc.1} parent=0 // pred_check
    _
  $region15: #{neural_modal_odefunc.1} parent=0 // pred_check_branch
    %17 = sbr.rel (0) target = $region17
  $region16: #{neural_modal_odefunc.1} parent=0 // pred_region
    _
  $region17: #{neural_modal_odefunc.1} parent=0 // pred_fallthru
    _
  // Predicated region
  $region18: #{neural_modal_odefunc.1} parent=0 // pred_check
    _
  $region19: #{neural_modal_odefunc.1} parent=0 // pred_check_branch
    %19 = sbr.rel (0) target = $region21
  $region20: #{neural_modal_odefunc.1} parent=0 // pred_region
    _
  $region21: #{neural_modal_odefunc.1} parent=0 // pred_fallthru
    _
  %v21 = vld [vmem:[%s0] sm:$0xff]
  %v22 = vld [vmem:[%s1] sm:$0x1]
  %24 = vset.pattern.permute.xlu0 0
  %25 = vperm.xlu0 %24, %v21
  %v26 = vpop.permute.xlu0 %25
  %v28 = vlaneseq
  %v29 = vshrl.u32 %v28, 7
  %v30 = vsub.s32 0, %v29
  %v31 = vrot.slane %v22, %v30
  %v32 = vmul.f32 %v26, %v31
  %v33 = vadd.f32 %v32, 0.0
  %v34 = vld [vmem:[%s2] sm:$0x1]
  %v35 = vlaneseq
  %v36 = vshrl.u32 %v35, 7
  %v37 = vsub.s32 0, %v36
  %v38 = vrot.slane %v34, %v37
  %v39 = vmul.f32 %v26, %v38
  %v40 = vadd.f32 %v39, 0.0
  %v41 = vld [vmem:[%s1 + $0x1] sm:$0x1]
  %42 = vset.pattern.permute.xlu0 1
  %43 = vperm.xlu0 %42, %v21
  %v44 = vpop.permute.xlu0 %43
  %v46 = vlaneseq
  %v47 = vshrl.u32 %v46, 7
  %v48 = vsub.s32 0, %v47
  %v49 = vrot.slane %v41, %v48
  %v50 = vmul.f32 %v44, %v49
  %v51 = vadd.f32 %v33, %v50
  %v52 = vld [vmem:[%s2 + $0x1] sm:$0x1]
  %v53 = vlaneseq
  %v54 = vshrl.u32 %v53, 7
  %v55 = vsub.s32 0, %v54
  %v56 = vrot.slane %v52, %v55
  %v57 = vmul.f32 %v44, %v56
  %v58 = vadd.f32 %v40, %v57
  %v59 = vld [vmem:[%s1 + $0x2] sm:$0x1]
  %60 = vset.pattern.permute.xlu0 2
  %61 = vperm.xlu0 %60, %v21
  %v62 = vpop.permute.xlu0 %61
  %v64 = vlaneseq
  %v65 = vshrl.u32 %v64, 7
  %v66 = vsub.s32 0, %v65
  %v67 = vrot.slane %v59, %v66
  %v68 = vmul.f32 %v62, %v67
  %v69 = vadd.f32 %v51, %v68
  %v70 = vld [vmem:[%s2 + $0x2] sm:$0x1]
  %v71 = vlaneseq
  %v72 = vshrl.u32 %v71, 7
  %v73 = vsub.s32 0, %v72
  %v74 = vrot.slane %v70, %v73
  %v75 = vmul.f32 %v62, %v74
  %v76 = vadd.f32 %v58, %v75
  %v77 = vld [vmem:[%s1 + $0x3] sm:$0x1]
  %78 = vset.pattern.permute.xlu0 3
  %79 = vperm.xlu0 %78, %v21
  %v80 = vpop.permute.xlu0 %79
  %v82 = vlaneseq
  %v83 = vshrl.u32 %v82, 7
  %v84 = vsub.s32 0, %v83
  %v85 = vrot.slane %v77, %v84
  %v86 = vmul.f32 %v80, %v85
  %v87 = vadd.f32 %v69, %v86
  %v88 = vld [vmem:[%s2 + $0x3] sm:$0x1]
  %v89 = vlaneseq
  %v90 = vshrl.u32 %v89, 7
  %v91 = vsub.s32 0, %v90
  %v92 = vrot.slane %v88, %v91
  %v93 = vmul.f32 %v80, %v92
  %v94 = vadd.f32 %v76, %v93
  %v95 = vmax.f32 %v87, 0.0
  %v96 = vpack.c.bf16 %v95, %v95
  %v97 = vld [vmem:[%s3] sm:$0xf]
  %v98 = vld [vmem:[%s3 + $0x4] sm:$0xf]
  %v99 = vld [vmem:[%s3 + $0x8] sm:$0xf]
  %v100 = vld [vmem:[%s3 + $0xc] sm:$0xf]
  %v101 = vld [vmem:[%s3 + $0x10] sm:$0xf]
  %v102 = vld [vmem:[%s3 + $0x14] sm:$0xf]
  %v103 = vld [vmem:[%s3 + $0x18] sm:$0xf]
  %v104 = vld [vmem:[%s3 + $0x1c] sm:$0xf]
  %v105 = vld [vmem:[%s3 + $0x20] sm:$0xf]
  %v106 = vld [vmem:[%s3 + $0x24] sm:$0xf]
  %v107 = vld [vmem:[%s3 + $0x28] sm:$0xf]
  %v108 = vld [vmem:[%s3 + $0x2c] sm:$0xf]
  %v109 = vld [vmem:[%s3 + $0x30] sm:$0xf]
  %v110 = vld [vmem:[%s3 + $0x34] sm:$0xf]
  %v111 = vld [vmem:[%s3 + $0x38] sm:$0xf]
  %v112 = vld [vmem:[%s3 + $0x3c] sm:$0xf]
  %v129 = vunpack.c.l.b16 %v97
  %v130 = vunpack.c.l.b16 %v98
  %v131 = vunpack.c.l.b16 %v99
  %v132 = vunpack.c.l.b16 %v100
  %v133 = vunpack.c.l.b16 %v101
  %v134 = vunpack.c.l.b16 %v102
  %v135 = vunpack.c.l.b16 %v103
  %v136 = vunpack.c.l.b16 %v104
  %v137 = vunpack.c.l.b16 %v105
  %v138 = vunpack.c.l.b16 %v106
  %v139 = vunpack.c.l.b16 %v107
  %v140 = vunpack.c.l.b16 %v108
  %v141 = vunpack.c.l.b16 %v109
  %v142 = vunpack.c.l.b16 %v110
  %v143 = vunpack.c.l.b16 %v111
  %v144 = vunpack.c.l.b16 %v112
  %v145 = vpack.c.b16 %v130, %v129
  %v146 = vpack.c.b16 %v132, %v131
  %v147 = vpack.c.b16 %v134, %v133
  %v148 = vpack.c.b16 %v136, %v135
  %v149 = vpack.c.b16 %v138, %v137
  %v150 = vpack.c.b16 %v140, %v139
  %v151 = vpack.c.b16 %v142, %v141
  %v152 = vpack.c.b16 %v144, %v143
  %161 = vmatprep.subr.bf16.mxu0 0
  %162 = vmatpush1.bf16.msra.mxu0 %v145
  %163 = vmatprep.subr.bf16.mxu0 0
  %164 = vmatpush1.bf16.msra.mxu0 %v146
  %165 = vmatprep.subr.bf16.mxu0 0
  %166 = vmatpush1.bf16.msra.mxu0 %v147
  %167 = vmatprep.subr.bf16.mxu0 0
  %168 = vmatpush1.bf16.msra.mxu0 %v148
  %169 = vmatprep.subr.bf16.mxu0 0
  %170 = vmatpush1.bf16.msra.mxu0 %v149
  %171 = vmatprep.subr.bf16.mxu0 0
  %172 = vmatpush1.bf16.msra.mxu0 %v150
  %173 = vmatprep.subr.bf16.mxu0 0
  %174 = vmatpush1.bf16.msra.mxu0 %v151
  %175 = vmatprep.subr.bf16.mxu0 0
  %176 = vmatpush1.bf16.msra.mxu0 %v152
  %177 = vmatprep.subr.bf16.mxu0 0
  %178 = vmatpush1.bf16.msra.mxu0 0
  %179 = vmatprep.subr.bf16.mxu0 0
  %180 = vmatpush1.bf16.msra.mxu0 0
  %181 = vmatprep.subr.bf16.mxu0 0
  %182 = vmatpush1.bf16.msra.mxu0 0
  %183 = vmatprep.subr.bf16.mxu0 0
  %184 = vmatpush1.bf16.msra.mxu0 0
  %185 = vmatprep.subr.bf16.mxu0 0
  %186 = vmatpush1.bf16.msra.mxu0 0
  %187 = vmatprep.subr.bf16.mxu0 0
  %188 = vmatpush1.bf16.msra.mxu0 0
  %189 = vmatprep.subr.bf16.mxu0 0
  %190 = vmatpush1.bf16.msra.mxu0 0
  %191 = vmatprep.subr.bf16.mxu0 0
  %192 = vmatpush1.bf16.msra.mxu0 0
  %193 = vmatprep.mubr.bf16.mxu0 0
  %194 = vmatmul.mubr.bf16.gmra.mrb[0].mxu0 %v96
  %v195 = vpop.f32.mrb[0].mxu0
  %v196 = vadd.f32 0.0, %v195
  %v197 = vpop.f32.mrb[0].mxu0
  %v198 = vpop.f32.mrb[0].mxu0
  %v199 = vpop.f32.mrb[0].mxu0
  %200 = vdwg.mxu0
  %v201 = vmax.f32 %v196, 0.0
  %v202 = vpack.c.bf16 %v201, %v201
  %v203 = vld [vmem:[%s4] sm:$0xf]
  %v204 = vld [vmem:[%s4 + $0x4] sm:$0xf]
  %v205 = vld [vmem:[%s4 + $0x8] sm:$0xf]
  %v206 = vld [vmem:[%s4 + $0xc] sm:$0xf]
  %v207 = vld [vmem:[%s4 + $0x10] sm:$0xf]
  %v208 = vld [vmem:[%s4 + $0x14] sm:$0xf]
  %v209 = vld [vmem:[%s4 + $0x18] sm:$0xf]
  %v210 = vld [vmem:[%s4 + $0x1c] sm:$0xf]
  %v211 = vld [vmem:[%s4 + $0x20] sm:$0xf]
  %v212 = vld [vmem:[%s4 + $0x24] sm:$0xf]
  %v213 = vld [vmem:[%s4 + $0x28] sm:$0xf]
  %v214 = vld [vmem:[%s4 + $0x2c] sm:$0xf]
  %v215 = vld [vmem:[%s4 + $0x30] sm:$0xf]
  %v216 = vld [vmem:[%s4 + $0x34] sm:$0xf]
  %v217 = vld [vmem:[%s4 + $0x38] sm:$0xf]
  %v218 = vld [vmem:[%s4 + $0x3c] sm:$0xf]
  %v235 = vunpack.c.l.b16 %v203
  %v236 = vunpack.c.l.b16 %v204
  %v237 = vunpack.c.l.b16 %v205
  %v238 = vunpack.c.l.b16 %v206
  %v239 = vunpack.c.l.b16 %v207
  %v240 = vunpack.c.l.b16 %v208
  %v241 = vunpack.c.l.b16 %v209
  %v242 = vunpack.c.l.b16 %v210
  %v243 = vunpack.c.l.b16 %v211
  %v244 = vunpack.c.l.b16 %v212
  %v245 = vunpack.c.l.b16 %v213
  %v246 = vunpack.c.l.b16 %v214
  %v247 = vunpack.c.l.b16 %v215
  %v248 = vunpack.c.l.b16 %v216
  %v249 = vunpack.c.l.b16 %v217
  %v250 = vunpack.c.l.b16 %v218
  %v251 = vpack.c.b16 %v236, %v235
  %v252 = vpack.c.b16 %v238, %v237
  %v253 = vpack.c.b16 %v240, %v239
  %v254 = vpack.c.b16 %v242, %v241
  %v255 = vpack.c.b16 %v244, %v243
  %v256 = vpack.c.b16 %v246, %v245
  %v257 = vpack.c.b16 %v248, %v247
  %v258 = vpack.c.b16 %v250, %v249
  %267 = vmatprep.subr.bf16.mxu0 0
  %268 = vmatpush1.bf16.msra.mxu0 %v251
  %269 = vmatprep.subr.bf16.mxu0 0
  %270 = vmatpush1.bf16.msra.mxu0 %v252
  %271 = vmatprep.subr.bf16.mxu0 0
  %272 = vmatpush1.bf16.msra.mxu0 %v253
  %273 = vmatprep.subr.bf16.mxu0 0
  %274 = vmatpush1.bf16.msra.mxu0 %v254
  %275 = vmatprep.subr.bf16.mxu0 0
  %276 = vmatpush1.bf16.msra.mxu0 %v255
  %277 = vmatprep.subr.bf16.mxu0 0
  %278 = vmatpush1.bf16.msra.mxu0 %v256
  %279 = vmatprep.subr.bf16.mxu0 0
  %280 = vmatpush1.bf16.msra.mxu0 %v257
  %281 = vmatprep.subr.bf16.mxu0 0
  %282 = vmatpush1.bf16.msra.mxu0 %v258
  %283 = vmatprep.subr.bf16.mxu0 0
  %284 = vmatpush1.bf16.msra.mxu0 0
  %285 = vmatprep.subr.bf16.mxu0 0
  %286 = vmatpush1.bf16.msra.mxu0 0
  %287 = vmatprep.subr.bf16.mxu0 0
  %288 = vmatpush1.bf16.msra.mxu0 0
  %289 = vmatprep.subr.bf16.mxu0 0
  %290 = vmatpush1.bf16.msra.mxu0 0
  %291 = vmatprep.subr.bf16.mxu0 0
  %292 = vmatpush1.bf16.msra.mxu0 0
  %293 = vmatprep.subr.bf16.mxu0 0
  %294 = vmatpush1.bf16.msra.mxu0 0
  %295 = vmatprep.subr.bf16.mxu0 0
  %296 = vmatpush1.bf16.msra.mxu0 0
  %297 = vmatprep.subr.bf16.mxu0 0
  %298 = vmatpush1.bf16.msra.mxu0 0
  %299 = vmatprep.mubr.bf16.mxu0 0
  %300 = vmatmul.mubr.bf16.gmra.mrb[0].mxu0 %v202
  %v301 = vpop.f32.mrb[0].mxu0
  %v302 = vadd.f32 0.0, %v301
  %v303 = vpop.f32.mrb[0].mxu0
  %v304 = vpop.f32.mrb[0].mxu0
  %v305 = vpop.f32.mrb[0].mxu0
  %306 = vdwg.mxu0
  %v307 = vadd.f32 %v94, %v302
  %vm308 = vcmask 31744
  %309 = vst.msk [vmem:[%s5] sm:$0xff] %vm308, %v307
  // Predicated region
  $region22: #{neural_modal_odefunc.1} parent=0 // pred_check
    _
  $region23: #{neural_modal_odefunc.1} parent=0 // pred_check_branch
    %311 = sbr.rel (0) target = $region25
  $region24: #{neural_modal_odefunc.1} parent=0 // pred_region
    _
  $region25: #{neural_modal_odefunc.1} parent=0 // pred_fallthru
    _
  // Predicated region
  $region26: #{neural_modal_odefunc.1} parent=0 // pred_check
    _
  $region27: #{neural_modal_odefunc.1} parent=0 // pred_check_branch
    %313 = sbr.rel (0) target = $region29
  $region28: #{neural_modal_odefunc.1} parent=0 // pred_region
    _
  $region29: #{neural_modal_odefunc.1} parent=0 // pred_fallthru
    _

</llo_original>
